<compile_context>
chip_gen: v5e
topology: v5e:2x2
jax: 0.10.0
libtpu: 0.0.40
codegen_flags: <defaults>
</compile_context>

<pallas_src>
import functools

import jax
import jax.numpy as jnp
from jax.experimental import pallas as pl
from jax.experimental.pallas import tpu as pltpu


def _root_kernel(n_children, residual, *refs):
    """refs = (child_0 .. child_{k-1}, w_0 .. w_{k-1}, shift, out)."""
    child_refs = refs[:n_children]
    w_refs = refs[n_children:2 * n_children]
    shift_ref = refs[2 * n_children]
    o_ref = refs[2 * n_children + 1]

    # 1x1 conv over the (virtually) concatenated children == sum of per-child
    # matmuls on the MXU.  BN scale is already folded into the weights.
    y = jnp.dot(w_refs[0][...], child_refs[0][...],
                preferred_element_type=jnp.float32)
    for i in range(1, n_children):
        y = y + jnp.dot(w_refs[i][...], child_refs[i][...],
                        preferred_element_type=jnp.float32)

    # Folded-BN shift: (Cout, 1) broadcast over the spatial lanes.
    y = y + shift_ref[...]

    if residual:
        # children[0] has exactly Cout channels (checked in the wrapper) and its
        # tile is already resident in VMEM — reuse it, no extra stream.
        y = y + child_refs[0][...].astype(jnp.float32)

    o_ref[...] = jnp.maximum(y, 0.0).astype(o_ref.dtype)


def _round_up(x, m):
    return ((x + m - 1) // m) * m


def _cdiv(a, b):
    return (a + b - 1) // b


def _vmem_capacity_bytes():
    """Physical per-core VMEM (generation-aware), with a conservative fallback."""
    try:
        info = pltpu.get_tpu_info()
        cap = int(getattr(info, "vmem_capacity_bytes", 0) or 0)
        if cap > 0:
            return cap
    except Exception:
        pass
    return 64 * 1024 * 1024  # v7x per-TensorCore VMEM (most restrictive)


def root_forward(children_nchw, w, gamma, beta, running_mean, running_var,
                 *, residual, eps=1e-5, tile_s=2048, min_grid_steps=4):
    """DLA `Root` forward.

    children_nchw: list of (N, Ci, H, W) arrays (NCHW, as in PyTorch), all the
                   same dtype (f32 or bf16).
    w: (Cout, Cin, 1, 1) conv weight with Cin == sum(Ci).
    Returns (N, Cout, H, W) in the children's dtype.
    """
    n_children = len(children_nchw)
    assert n_children >= 1
    n, _, h, wd = children_nchw[0].shape
    s = h * wd
    c_list = [int(c.shape[1]) for c in children_nchw]
    cin = sum(c_list)
    cout = int(w.shape[0])
    assert int(w.shape[1]) == cin, (
        f"conv weight Cin ({w.shape[1]}) must equal sum of child channels ({cin})")
    for c in children_nchw:
        assert c.shape[0] == n and c.shape[2] == h and c.shape[3] == wd
    if residual:
        assert c_list[0] == cout, (
            "residual=True requires children[0] channels == out_channels "
            f"(got {c_list[0]} vs {cout})")

    x_dtype = children_nchw[0].dtype
    out_dtype = x_dtype
    # Stream weights in the activation dtype (bf16 nets -> single-pass bf16 MXU);
    # the BN fold itself is always done in f32 before the cast.
    w_dtype = jnp.bfloat16 if x_dtype == jnp.bfloat16 else jnp.float32

    # ---- Fold eval-mode BatchNorm: scale into W, shift stays separate --------
    # TODO(synk): training-mode BN (batch-stat update) is not implemented.
    inv_std = 1.0 / jnp.sqrt(running_var.astype(jnp.float32) + eps)
    scale = gamma.astype(jnp.float32) * inv_std                        # (Cout,)
    shift = (beta.astype(jnp.float32)
             - running_mean.astype(jnp.float32) * scale).reshape(cout, 1)
    w_mat = w.reshape(cout, cin).astype(jnp.float32) * scale[:, None]  # (Cout, Cin)

    # Split the weight per child so the activation concatenate is never built.
    w_parts = []
    off = 0
    for ci in c_list:
        w_parts.append(w_mat[:, off:off + ci].astype(w_dtype))
        off += ci

    # NCHW -> (N, Ci, S): pure reshape, no data movement for contiguous NCHW.
    xs = [c.reshape(n, ci, s) for c, ci in zip(children_nchw, c_list)]

    # ---- Generation-aware tile / VMEM budgeting -------------------------------
    in_bytes = jnp.dtype(x_dtype).itemsize
    out_bytes = jnp.dtype(out_dtype).itemsize
    w_bytes = jnp.dtype(w_dtype).itemsize

    vmem_cap = _vmem_capacity_bytes()
    vmem_limit = min(int(vmem_cap * 0.65), 100 * 1024 * 1024)
    # Resident (constant-index) streams: weights + shift, double-buffered by the
    # auto-pipeline.  Pipelined streams: children + output, double-buffered.
    resident_bytes = 2 * (cout * cin * w_bytes + cout * 4)
    per_lane_bytes = 2 * (cin * in_bytes + cout * out_bytes)
    data_budget = int(vmem_limit * 0.8) - resident_bytes
    tile_vmem = max(128, (max(data_budget, 0) // max(per_lane_bytes, 1)) // 128 * 128)

    s128 = _round_up(s, 128)
    tile_cap = max(128, _round_up(int(tile_s), 128))   # user cap, lane-aligned

    if s < 128:
        tile = s                       # full-dim block satisfies lane constraint
    else:
        tile = min(tile_cap, tile_vmem, s128)
        # Guarantee enough grid steps for DMA/compute overlap and so both v7x
        # TensorCores get work when N and S are small.
        while tile > 128 and n * _cdiv(s, tile) < min_grid_steps:
            tile = max(128, _round_up(tile // 2, 128))

    grid = (n, _cdiv(s, tile))

    child_specs = [
        pl.BlockSpec((None, ci, tile), lambda b, si: (b, 0, si))
        for ci in c_list
    ]
    w_specs = [
        pl.BlockSpec((cout, ci), lambda b, si: (0, 0))
        for ci in c_list
    ]
    shift_spec = pl.BlockSpec((cout, 1), lambda b, si: (0, 0))
    out_spec = pl.BlockSpec((None, cout, tile), lambda b, si: (b, 0, si))

    bytes_accessed = (sum(int(x.size) for x in xs) * in_bytes
                      + n * cout * s * out_bytes
                      + cout * cin * w_bytes + cout * 4)
    cost = pl.CostEstimate(flops=2 * n * cout * cin * s,
                           bytes_accessed=int(bytes_accessed),
                           transcendentals=0)

    kernel = functools.partial(_root_kernel, n_children, residual)
    out = pl.pallas_call(
        kernel,
        out_shape=jax.ShapeDtypeStruct((n, cout, s), out_dtype),
        grid_spec=pltpu.PrefetchScalarGridSpec(
            num_scalar_prefetch=0,
            grid=grid,
            in_specs=child_specs + w_specs + [shift_spec],
            out_specs=out_spec,
        ),
        compiler_params=pltpu.CompilerParams(
            dimension_semantics=("parallel", "parallel"),
            vmem_limit_bytes=vmem_limit,
        ),
        cost_estimate=cost,
    )(*xs, *w_parts, shift)

    return out.reshape(n, cout, h, wd)


def _reference(children, w, gamma, beta, mean, var, residual, eps=1e-5):
    x = jnp.concatenate([c.astype(jnp.float32) for c in children], axis=1)
    cout, cin = w.shape[0], w.shape[1]
    y = jnp.einsum("nchw,oc->nohw", x, w.reshape(cout, cin))
    inv_std = 1.0 / jnp.sqrt(var + eps)
    scale = gamma * inv_std
    y = y * scale[None, :, None, None] + (beta - mean * scale)[None, :, None, None]
    if residual:
        y = y + children[0].astype(jnp.float32)
    return jnp.maximum(y, 0.0)


if __name__ == "__main__":
    key = jax.random.PRNGKey(0)
    k1, k2, k3, k4, k5, k6 = jax.random.split(key, 6)

    # Root(in_channels=8, out_channels=4, kernel_size=1, residual=True)
    n, h, wd = 2, 16, 16
    c0, c1 = 4, 4            # two children, virtually concatenated -> Cin = 8
    cin, cout = c0 + c1, 4   # residual requires children[0].C == out_channels

    child0 = jax.random.normal(k1, (n, c0, h, wd), dtype=jnp.float32)
    child1 = jax.random.normal(k2, (n, c1, h, wd), dtype=jnp.float32)

    conv_w = jax.random.normal(k3, (cout, cin, 1, 1), dtype=jnp.float32) * 0.1
    gamma = 1.0 + 0.1 * jax.random.normal(k4, (cout,), dtype=jnp.float32)
    beta = 0.1 * jax.random.normal(k5, (cout,), dtype=jnp.float32)
    running_mean = 0.05 * jax.random.normal(k6, (cout,), dtype=jnp.float32)
    running_var = jnp.ones((cout,), dtype=jnp.float32)

    # residual=True, f32 (exact path)
    out = root_forward([child0, child1], conv_w, gamma, beta,
                       running_mean, running_var, residual=True)
    out = jax.block_until_ready(out)
    ref = _reference([child0, child1], conv_w, gamma, beta,
                     running_mean, running_var, residual=True)
    assert out.shape == (n, cout, h, wd)
    assert jnp.allclose(out, ref, atol=1e-5, rtol=1e-5)

    # residual=False, f32
    out_nr = root_forward([child0, child1], conv_w, gamma, beta,
                          running_mean, running_var, residual=False)
    out_nr = jax.block_until_ready(out_nr)
    ref_nr = _reference([child0, child1], conv_w, gamma, beta,
                        running_mean, running_var, residual=False)
    assert jnp.allclose(out_nr, ref_nr, atol=1e-5, rtol=1e-5)

    # bf16 streaming path (half the DMA bytes; f32 accumulation in-kernel)
    child0_bf = child0.astype(jnp.bfloat16)
    child1_bf = child1.astype(jnp.bfloat16)
    out_bf = root_forward([child0_bf, child1_bf], conv_w, gamma, beta,
                          running_mean, running_var, residual=True)
    out_bf = jax.block_until_ready(out_bf)
    assert out_bf.dtype == jnp.bfloat16
    ref_bf = _reference([child0_bf, child1_bf], conv_w, gamma, beta,
                        running_mean, running_var, residual=True)
    assert jnp.allclose(out_bf.astype(jnp.float32), ref_bf, atol=6e-2, rtol=6e-2)

    print("KERNEL_OK")
</pallas_src>

<mosaic_0001>
module attributes {stable_mosaic.version = 11 : i64} {
  func.func @_root_kernel(%arg0: i32, %arg1: i32, %arg2: memref<1x4x128xf32, #tpu.memory_space<vmem>>, %arg3: memref<1x4x128xf32, #tpu.memory_space<vmem>>, %arg4: memref<4x4xf32, #tpu.memory_space<vmem>>, %arg5: memref<4x4xf32, #tpu.memory_space<vmem>>, %arg6: memref<4x1xf32, #tpu.memory_space<vmem>>, %arg7: memref<1x4x128xf32, #tpu.memory_space<vmem>>) attributes {dimension_semantics = [#tpu.dimension_semantics<parallel>, #tpu.dimension_semantics<parallel>], iteration_bounds = array<i64: 2, 2>, scalar_prefetch = 0 : i64, scratch_operands = 0 : i64, tpu.core_type = #tpu.core_type<tc>, window_params = [{transform_indices = @transform_0, window_bounds = array<i64: 1, 4, 128>}, {transform_indices = @transform_1, window_bounds = array<i64: 1, 4, 128>}, {pipeline_mode = #tpu.pipeline_mode<synchronous>, transform_indices = @transform_2, window_bounds = array<i64: 4, 4>}, {pipeline_mode = #tpu.pipeline_mode<synchronous>, transform_indices = @transform_3, window_bounds = array<i64: 4, 4>}, {pipeline_mode = #tpu.pipeline_mode<synchronous>, transform_indices = @transform_4, window_bounds = array<i64: 4, 1>}, {transform_indices = @transform_5, window_bounds = array<i64: 1, 4, 128>}]} {
    %c0 = arith.constant 0 : index
    %c0_0 = arith.constant 0 : index
    %0 = vector.load %arg4[%c0, %c0_0] : memref<4x4xf32, #tpu.memory_space<vmem>>, vector<4x4xf32>
    %c0_1 = arith.constant 0 : index
    %c0_2 = arith.constant 0 : index
    %c0_3 = arith.constant 0 : index
    %1 = vector.load %arg2[%c0_1, %c0_2, %c0_3] : memref<1x4x128xf32, #tpu.memory_space<vmem>>, vector<1x4x128xf32>
    %2 = vector.shape_cast %1 : vector<1x4x128xf32> to vector<4x128xf32>
    %cst = arith.constant dense<0.000000e+00> : vector<4x128xf32>
    %3 = tpu.matmul %0, %2, %cst {dimension_numbers = #tpu.dot_dimension_numbers<[1], [0], [0], [1], [0, 0, 1, 1], [], []>} : vector<4x4xf32>, vector<4x128xf32>, vector<4x128xf32> -> vector<4x128xf32>
    %c0_4 = arith.constant 0 : index
    %c0_5 = arith.constant 0 : index
    %4 = vector.load %arg5[%c0_4, %c0_5] : memref<4x4xf32, #tpu.memory_space<vmem>>, vector<4x4xf32>
    %c0_6 = arith.constant 0 : index
    %c0_7 = arith.constant 0 : index
    %c0_8 = arith.constant 0 : index
    %5 = vector.load %arg3[%c0_6, %c0_7, %c0_8] : memref<1x4x128xf32, #tpu.memory_space<vmem>>, vector<1x4x128xf32>
    %6 = vector.shape_cast %5 : vector<1x4x128xf32> to vector<4x128xf32>
    %cst_9 = arith.constant dense<0.000000e+00> : vector<4x128xf32>
    %7 = tpu.matmul %4, %6, %cst_9 {dimension_numbers = #tpu.dot_dimension_numbers<[1], [0], [0], [1], [0, 0, 1, 1], [], []>} : vector<4x4xf32>, vector<4x128xf32>, vector<4x128xf32> -> vector<4x128xf32>
    %8 = arith.addf %3, %7 : vector<4x128xf32>
    %c0_10 = arith.constant 0 : index
    %c0_11 = arith.constant 0 : index
    %9 = vector.load %arg6[%c0_10, %c0_11] : memref<4x1xf32, #tpu.memory_space<vmem>>, vector<4x1xf32>
    %10 = vector.broadcast %9 : vector<4x1xf32> to vector<4x128xf32>
    %11 = arith.addf %8, %10 : vector<4x128xf32>
    %c0_12 = arith.constant 0 : index
    %c0_13 = arith.constant 0 : index
    %c0_14 = arith.constant 0 : index
    %12 = vector.load %arg2[%c0_12, %c0_13, %c0_14] : memref<1x4x128xf32, #tpu.memory_space<vmem>>, vector<1x4x128xf32>
    %13 = vector.shape_cast %12 : vector<1x4x128xf32> to vector<4x128xf32>
    %14 = arith.addf %11, %13 : vector<4x128xf32>
    %cst_15 = arith.constant 0.000000e+00 : f32
    %15 = vector.broadcast %cst_15 : f32 to vector<4x128xf32>
    %16 = arith.maximumf %14, %15 : vector<4x128xf32>
    %c0_16 = arith.constant 0 : index
    %c0_17 = arith.constant 0 : index
    %c0_18 = arith.constant 0 : index
    %17 = vector.load %arg7[%c0_16, %c0_17, %c0_18] : memref<1x4x128xf32, #tpu.memory_space<vmem>>, vector<1x4x128xf32>
    %18 = vector.shape_cast %17 : vector<1x4x128xf32> to vector<4x128xf32>
    %19 = vector.shape_cast %16 : vector<4x128xf32> to vector<1x4x128xf32>
    tpu.vector_store %arg7[%c0_16, %c0_17, %c0_18], %19 {strides = array<i32>} : memref<1x4x128xf32, #tpu.memory_space<vmem>>, vector<1x4x128xf32>,
    return
  }
  func.func @transform_0(%arg0: i32, %arg1: i32) -> (i32, i32, i32) {
    %c0_i32 = arith.constant 0 : i32
    %c0_i32_0 = arith.constant 0 : i32
    return %arg0, %c0_i32, %arg1 : i32, i32, i32
  }
  func.func @transform_1(%arg0: i32, %arg1: i32) -> (i32, i32, i32) {
    %c0_i32 = arith.constant 0 : i32
    %c0_i32_0 = arith.constant 0 : i32
    return %arg0, %c0_i32, %arg1 : i32, i32, i32
  }
  func.func @transform_2(%arg0: i32, %arg1: i32) -> (i32, i32) {
    %c0_i32 = arith.constant 0 : i32
    %c0_i32_0 = arith.constant 0 : i32
    %c0_i32_1 = arith.constant 0 : i32
    return %c0_i32, %c0_i32_0 : i32, i32
  }
  func.func @transform_3(%arg0: i32, %arg1: i32) -> (i32, i32) {
    %c0_i32 = arith.constant 0 : i32
    %c0_i32_0 = arith.constant 0 : i32
    %c0_i32_1 = arith.constant 0 : i32
    return %c0_i32, %c0_i32_0 : i32, i32
  }
  func.func @transform_4(%arg0: i32, %arg1: i32) -> (i32, i32) {
    %c0_i32 = arith.constant 0 : i32
    %c0_i32_0 = arith.constant 0 : i32
    %c0_i32_1 = arith.constant 0 : i32
    return %c0_i32, %c0_i32_0 : i32, i32
  }
  func.func @transform_5(%arg0: i32, %arg1: i32) -> (i32, i32, i32) {
    %c0_i32 = arith.constant 0 : i32
    %c0_i32_0 = arith.constant 0 : i32
    return %arg0, %c0_i32, %arg1 : i32, i32, i32
  }
}

</mosaic_0001>

<llo_original>
// kernel: tpu_custom_call.1
$region0: #{tpu_custom_call.1}
  #allocation0 [shape = 'u32[]', space=smem, size = 0x4, offset = 0x4, fixed_abs, tag = 'smem constant byte address 0x4 - core index']
  #allocation1 [shape = 'u32[72,128]{1,0:T(1,128)}', space=vmem, size = 0x9000, scoped, tag = 'internal scratch']
  %s0 = inlined_call_operand.hbm [shape: f32[2,4,256], index: 0, kind: input, shape index: {}]
  %s1 = inlined_call_operand.hbm [shape: f32[2,4,256], index: 1, kind: input, shape index: {}]
  %s2 = inlined_call_operand.vmem [shape: f32[4,4], index: 2, kind: input, shape index: {}]
  %s3 = inlined_call_operand.hbm [shape: f32[4,4], index: 3, kind: input, shape index: {}]
  %s4 = inlined_call_operand.vmem [shape: f32[4,1], index: 4, kind: input, shape index: {}]
  %s5 = inlined_call_operand.hbm [shape: f32[2,4,256], index: 5, kind: output, shape index: {}]
  %s6 = sld [smem:[#allocation0]]
  $region65: #{tpu_custom_call.1} parent=0
    _
  %s8 = ssub.s32 1, %s6
  %s9 = scalar_select 0, %s8, %s6
  $region1: #{tpu_custom_call.1} parent=0
    #allocation2 [shape = 'u8[4096]{0}', space=vmem, size = 0x1000, scoped, tag = 'input window, operand 0']
    #allocation3 [shape = 's32[2]{0}', space=sflag, size = 0x8, scoped, tag = 'scoped memory for tpu_custom_call.1']
    #allocation4 [shape = 's32[2]{0}', space=sflag, size = 0x8, scoped, tag = 'scoped memory for tpu_custom_call.1']
    #allocation5 [shape = 'u8[4096]{0}', space=vmem, size = 0x1000, scoped, tag = 'input window, operand 1']
    #allocation6 [shape = 's32[2]{0}', space=sflag, size = 0x8, scoped, tag = 'scoped memory for tpu_custom_call.1']
    #allocation7 [shape = 'u8[2048]{0}', space=vmem, size = 0x800, scoped, tag = 'input window, operand 3, single buffered']
    #allocation8 [shape = 'u8[4096]{0}', space=vmem, size = 0x1000, scoped, tag = 'output window, operand 0']
    %10 = vsyncpa [#allocation3], 0
    %s11 = scalar_lea.sflag [#allocation3], 1
    %12 = vsyncpa %s11, 0
    %13 = vsyncpa [#allocation6], 0
    %s14 = scalar_lea.sflag [#allocation6], 1
    %15 = vsyncpa %s14, 0
    %16 = vsyncpa [#allocation4], 0
    %s17 = scalar_lea.sflag [#allocation4], 1
    %18 = vsyncpa %s17, 0
    loop: start=0, step=1, limit=6
    $region2: #{tpu_custom_call.1} parent=1 // loop_pre_header
      _
    $region3: #{tpu_custom_call.1} parent=1 // loop_header
      %s20 = sphi 0, %s24
      %p21 = scmp.ge.s32.totalorder %s20, 6
      %s27 = sphi 0, %s39
      %s28 = sphi 0, %s35
      %s29 = sphi 0, %s27
      %s30 = sphi 0, %s28
      %s31 = sphi 0, %s29
      %s32 = sphi 0, %s30
      %s44 = sphi 0, %s46
      %s47 = sphi 0, %s44
      %s48 = sphi 0, %s47
      %s64 = sphi 0, %s48
      %s72 = sphi 0, %s74
      %s75 = sphi 0, %s72
      %s76 = sphi 0, %s75
      %s92 = sphi 0, %s76
      %s96 = sphi 0, %s96
      %s98 = sphi 0, %s96
      %s99 = sphi 0, %s98
      %s113 = sphi 0, %s99
      %s117 = sphi 0, %s117
      %s119 = sphi 0, %s117
      %s120 = sphi 0, %s119
      %s134 = sphi 0, %s120
      %s138 = sphi 0, %s138
      %s140 = sphi 0, %s138
      %s141 = sphi 0, %s140
      %s155 = sphi 0, %s141
      %s163 = sphi 0, %s165
      %s166 = sphi 0, %s163
      %s167 = sphi 0, %s166
      %s183 = sphi 0, %s167
    $region4: #{tpu_custom_call.1} parent=1 // loop_header_branch
      %23 = sbr.rel (%p21) target = $region8
    $region5: #{tpu_custom_call.1} parent=1 // loop_body
      %s25 = ssub.s32 %s20, 1
      %s26 = ssub.s32 %s20, 2
      %s33 = sadd.s32 1, %s28
      %p34 = scmp.ge.s32.totalorder %s33, 2
      %s35 = scalar_select %p34, 0, %s33
      %s36 = sadd.s32 1, %s27
      %s37 = scalar_select %p34, %s36, %s27
      %p38 = scmp.ge.s32.totalorder %s37, 2
      %s39 = scalar_select %p38, 0, %s37
      %s40 = ssub.s32 %s27, %s39
      %s41 = ssub.s32 %s28, %s35
      %s42 = sor.u32 %s40, %s41
      %p43 = scmp.eq.s32.totalorder %s42, 0
      %s45 = sadd.s32 %s44, 1
      %s46 = scalar_select %p43, %s44, %s45
      %p49 = pneg %p43
      %p50 = scmp.eq.s32.totalorder %s20, 3
      %p51 = por %p49, %p50
      %p52 = scmp.ne.s32.totalorder %s44, %s47
      %p53 = scmp.eq.s32.totalorder %s20, 0
      %p54 = por %p52, %p53
      %p55 = scmp.ne.s32.totalorder %s44, %s47
      %p56 = scmp.eq.s32.totalorder %s25, 3
      %p57 = por %p55, %p56
      %p58 = scmp.ne.s32.totalorder %s47, %s48
      %p59 = scmp.eq.s32.totalorder %s25, 0
      %p60 = por %p58, %p59
      %p61 = scmp.ne.s32.totalorder %s47, %s48
      %p62 = scmp.eq.s32.totalorder %s26, 3
      %p63 = por %p61, %p62
      %p65 = scmp.ne.s32.totalorder %s48, %s64
      %p66 = scmp.eq.s32.totalorder %s26, 0
      %p67 = por %p65, %p66
      %s68 = ssub.s32 %s27, %s39
      %s69 = ssub.s32 %s28, %s35
      %s70 = sor.u32 %s68, %s69
      %p71 = scmp.eq.s32.totalorder %s70, 0
      %s73 = sadd.s32 %s72, 1
      %s74 = scalar_select %p71, %s72, %s73
      %p77 = pneg %p71
      %p78 = scmp.eq.s32.totalorder %s20, 3
      %p79 = por %p77, %p78
      %p80 = scmp.ne.s32.totalorder %s72, %s75
      %p81 = scmp.eq.s32.totalorder %s20, 0
      %p82 = por %p80, %p81
      %p83 = scmp.ne.s32.totalorder %s72, %s75
      %p84 = scmp.eq.s32.totalorder %s25, 3
      %p85 = por %p83, %p84
      %p86 = scmp.ne.s32.totalorder %s75, %s76
      %p87 = scmp.eq.s32.totalorder %s25, 0
      %p88 = por %p86, %p87
      %p89 = scmp.ne.s32.totalorder %s75, %s76
      %p90 = scmp.eq.s32.totalorder %s26, 3
      %p91 = por %p89, %p90
      %p93 = scmp.ne.s32.totalorder %s76, %s92
      %p94 = scmp.eq.s32.totalorder %s26, 0
      %p95 = por %p93, %p94
      %s97 = sadd.s32 %s96, 1
      %p100 = scmp.eq.s32.totalorder %s20, 3
      %p101 = scmp.ne.s32.totalorder %s96, %s98
      %p102 = scmp.eq.s32.totalorder %s20, 0
      %p103 = por %p101, %p102
      %p104 = scmp.ne.s32.totalorder %s96, %s98
      %p105 = scmp.eq.s32.totalorder %s25, 3
      %p106 = por %p104, %p105
      %p107 = scmp.ne.s32.totalorder %s98, %s99
      %p108 = scmp.eq.s32.totalorder %s25, 0
      %p109 = por %p107, %p108
      %p110 = scmp.ne.s32.totalorder %s98, %s99
      %p111 = scmp.eq.s32.totalorder %s26, 3
      %p112 = por %p110, %p111
      %p114 = scmp.ne.s32.totalorder %s99, %s113
      %p115 = scmp.eq.s32.totalorder %s26, 0
      %p116 = por %p114, %p115
      %s118 = sadd.s32 %s117, 1
      %p121 = scmp.eq.s32.totalorder %s20, 3
      %p122 = scmp.ne.s32.totalorder %s117, %s119
      %p123 = scmp.eq.s32.totalorder %s20, 0
      %p124 = por %p122, %p123
      %p125 = scmp.ne.s32.totalorder %s117, %s119
      %p126 = scmp.eq.s32.totalorder %s25, 3
      %p127 = por %p125, %p126
      %p128 = scmp.ne.s32.totalorder %s119, %s120
      %p129 = scmp.eq.s32.totalorder %s25, 0
      %p130 = por %p128, %p129
      %p131 = scmp.ne.s32.totalorder %s119, %s120
      %p132 = scmp.eq.s32.totalorder %s26, 3
      %p133 = por %p131, %p132
      %p135 = scmp.ne.s32.totalorder %s120, %s134
      %p136 = scmp.eq.s32.totalorder %s26, 0
      %p137 = por %p135, %p136
      %s139 = sadd.s32 %s138, 1
      %p142 = scmp.eq.s32.totalorder %s20, 3
      %p143 = scmp.ne.s32.totalorder %s138, %s140
      %p144 = scmp.eq.s32.totalorder %s20, 0
      %p145 = por %p143, %p144
      %p146 = scmp.ne.s32.totalorder %s138, %s140
      %p147 = scmp.eq.s32.totalorder %s25, 3
      %p148 = por %p146, %p147
      %p149 = scmp.ne.s32.totalorder %s140, %s141
      %p150 = scmp.eq.s32.totalorder %s25, 0
      %p151 = por %p149, %p150
      %p152 = scmp.ne.s32.totalorder %s140, %s141
      %p153 = scmp.eq.s32.totalorder %s26, 3
      %p154 = por %p152, %p153
      %p156 = scmp.ne.s32.totalorder %s141, %s155
      %p157 = scmp.eq.s32.totalorder %s26, 0
      %p158 = por %p156, %p157
      %s159 = ssub.s32 %s27, %s39
      %s160 = ssub.s32 %s28, %s35
      %s161 = sor.u32 %s159, %s160
      %p162 = scmp.eq.s32.totalorder %s161, 0
      %s164 = sadd.s32 %s163, 1
      %s165 = scalar_select %p162, %s163, %s164
      %p168 = pneg %p162
      %p169 = scmp.eq.s32.totalorder %s20, 3
      %p170 = por %p168, %p169
      %p171 = scmp.ne.s32.totalorder %s163, %s166
      %p172 = scmp.eq.s32.totalorder %s20, 0
      %p173 = por %p171, %p172
      %p174 = scmp.ne.s32.totalorder %s163, %s166
      %p175 = scmp.eq.s32.totalorder %s25, 3
      %p176 = por %p174, %p175
      %p177 = scmp.ne.s32.totalorder %s166, %s167
      %p178 = scmp.eq.s32.totalorder %s25, 0
      %p179 = por %p177, %p178
      %p180 = scmp.ne.s32.totalorder %s166, %s167
      %p181 = scmp.eq.s32.totalorder %s26, 3
      %p182 = por %p180, %p181
      %p184 = scmp.ne.s32.totalorder %s167, %s183
      %p185 = scmp.eq.s32.totalorder %s26, 0
      %p186 = por %p184, %p185
      %p187 = scmp.le.s32.totalorder 1, %s20
      %p188 = scmp.lt.s32.totalorder %s20, 5
      %p189 = pnand %p187, %p188
      %p190 = pneg %p189
      // Predicated region
      $region9: #{tpu_custom_call.1} parent=5 // pred_check
        _
      $region10: #{tpu_custom_call.1} parent=5 // pred_check_branch
        %192 = sbr.rel (%p189) target = $region12
      $region11: #{tpu_custom_call.1} parent=5 // pred_region
        %s193 = ssub.s32 %s20, 1
        // Predicated region
        $region13: #{tpu_custom_call.1} parent=11 // pred_check
          %p194 = pneg %p109
        $region14: #{tpu_custom_call.1} parent=11 // pred_check_branch
          %196 = sbr.rel (%p194) target = $region16
        $region15: #{tpu_custom_call.1} parent=11 // pred_region
          _
        $region16: #{tpu_custom_call.1} parent=11 // pred_fallthru
          _
        // Predicated region
        $region17: #{tpu_custom_call.1} parent=11 // pred_check
          %p197 = pneg %p130
        $region18: #{tpu_custom_call.1} parent=11 // pred_check_branch
          %199 = sbr.rel (%p197) target = $region20
        $region19: #{tpu_custom_call.1} parent=11 // pred_region
          %201 = vsyncadd [#allocation6], 0
          %s203 = sshll.u32 %s3, 4
          %s204 = int_to_ptr.hbm [resolvable:$true] %s203
          %s205 = sshll.u32 [#allocation7], 4
          %s206 = int_to_ptr.vmem [resolvable:$true] %s205
          %208 = dma.hbm_to_vmem [thread:$0]  %s204, 64, %s206, [#allocation6]
        $region20: #{tpu_custom_call.1} parent=11 // pred_fallthru
          _
        // Predicated region
        $region21: #{tpu_custom_call.1} parent=11 // pred_check
          %p209 = pneg %p151
        $region22: #{tpu_custom_call.1} parent=11 // pred_check_branch
          %211 = sbr.rel (%p209) target = $region24
        $region23: #{tpu_custom_call.1} parent=11 // pred_region
          _
        $region24: #{tpu_custom_call.1} parent=11 // pred_fallthru
          _
      $region12: #{tpu_custom_call.1} parent=5 // pred_fallthru
        _
      %p212 = scmp.lt.s32.totalorder %s20, 4
      // Predicated region
      $region25: #{tpu_custom_call.1} parent=5 // pred_check
        %p213 = pneg %p212
      $region26: #{tpu_custom_call.1} parent=5 // pred_check_branch
        %215 = sbr.rel (%p213) target = $region28
      $region27: #{tpu_custom_call.1} parent=5 // pred_region
        // Predicated region
        $region29: #{tpu_custom_call.1} parent=27 // pred_check
          %p216 = pneg %p54
        $region30: #{tpu_custom_call.1} parent=27 // pred_check_branch
          %218 = sbr.rel (%p216) target = $region32
        $region31: #{tpu_custom_call.1} parent=27 // pred_region
          %s219 = sand.u32 %s44, 1
          %s220 = scalar_lea.sflag [#allocation3], %s219
          %s221 = sand.u32 %s44, 1
          %s222 = smul.addr %s221, 4
          %s223 = scalar_lea.vmem [#allocation2], %s222
          %225 = vsyncadd %s220, 0
          %s226 = smul.addr %s27, 2
          %s227 = sadd.s32 %s28, %s226
          %s228 = smul.addr %s227, 4
          %s229 = scalar_lea.hbm %s0, %s228
          %s231 = sshll.u32 %s229, 4
          %s232 = int_to_ptr.hbm [resolvable:$true] %s231
          %s233 = sshll.u32 %s223, 4
          %s234 = int_to_ptr.vmem [resolvable:$true] %s233
          %236 = dma.hbm_to_vmem [thread:$0]  %s232, 64, %s234, %s220
        $region32: #{tpu_custom_call.1} parent=27 // pred_fallthru
          _
        // Predicated region
        $region33: #{tpu_custom_call.1} parent=27 // pred_check
          %p237 = pneg %p82
        $region34: #{tpu_custom_call.1} parent=27 // pred_check_branch
          %239 = sbr.rel (%p237) target = $region36
        $region35: #{tpu_custom_call.1} parent=27 // pred_region
          %s240 = sand.u32 %s20, 1
          %s241 = scalar_lea.sflag [#allocation6], %s240
          %s242 = sand.u32 %s72, 1
          %s243 = smul.addr %s242, 4
          %s244 = scalar_lea.vmem [#allocation5], %s243
          %246 = vsyncadd %s241, 0
          %s247 = smul.addr %s27, 2
          %s248 = sadd.s32 %s28, %s247
          %s249 = smul.addr %s248, 4
          %s250 = scalar_lea.hbm %s1, %s249
          %s252 = sshll.u32 %s250, 4
          %s253 = int_to_ptr.hbm [resolvable:$true] %s252
          %s254 = sshll.u32 %s244, 4
          %s255 = int_to_ptr.vmem [resolvable:$true] %s254
          %257 = dma.hbm_to_vmem [thread:$0]  %s253, 64, %s255, %s241
        $region36: #{tpu_custom_call.1} parent=27 // pred_fallthru
          _
      $region28: #{tpu_custom_call.1} parent=5 // pred_fallthru
        _
      %p258 = scmp.le.s32.totalorder 1, %s20
      %p259 = scmp.lt.s32.totalorder %s20, 5
      %p260 = pnand %p258, %p259
      %p261 = pneg %p260
      // Predicated region
      $region37: #{tpu_custom_call.1} parent=5 // pred_check
        _
      $region38: #{tpu_custom_call.1} parent=5 // pred_check_branch
        %263 = sbr.rel (%p260) target = $region40
      $region39: #{tpu_custom_call.1} parent=5 // pred_region
        %s264 = ssub.s32 %s20, 1
        %s265 = sand.u32 %s47, 1
        %s266 = scalar_lea.sflag [#allocation3], %s265
        %s267 = sand.u32 %s47, 1
        %s268 = smul.addr %s267, 4
        %s269 = scalar_lea.vmem [#allocation2], %s268
        // Predicated region
        $region41: #{tpu_custom_call.1} parent=39 // pred_check
          %p270 = pneg %p60
        $region42: #{tpu_custom_call.1} parent=39 // pred_check_branch
          %272 = sbr.rel (%p270) target = $region44
        $region43: #{tpu_custom_call.1} parent=39 // pred_region
          %274 = dma.done %s266, 64
        $region44: #{tpu_custom_call.1} parent=39 // pred_fallthru
          _
        %s275 = sand.u32 %s25, 1
        %s276 = scalar_lea.sflag [#allocation6], %s275
        %s277 = sand.u32 %s75, 1
        %s278 = smul.addr %s277, 4
        %s279 = scalar_lea.vmem [#allocation5], %s278
        // Predicated region
        $region45: #{tpu_custom_call.1} parent=39 // pred_check
          %p280 = pneg %p88
        $region46: #{tpu_custom_call.1} parent=39 // pred_check_branch
          %282 = sbr.rel (%p280) target = $region48
        $region47: #{tpu_custom_call.1} parent=39 // pred_region
          %284 = dma.done %s276, 64
        $region48: #{tpu_custom_call.1} parent=39 // pred_fallthru
          _
        // Predicated region
        $region49: #{tpu_custom_call.1} parent=39 // pred_check
          %p285 = pneg %p130
        $region50: #{tpu_custom_call.1} parent=39 // pred_check_branch
          %287 = sbr.rel (%p285) target = $region52
        $region51: #{tpu_custom_call.1} parent=39 // pred_region
          %289 = dma.done [#allocation6], 64
        $region52: #{tpu_custom_call.1} parent=39 // pred_fallthru
          _
        %s290 = sand.u32 %s47, 1
        %s291 = scalar_lea.sflag [#allocation3], %s290
        %s292 = sand.u32 %s47, 1
        %s293 = smul.addr %s292, 4
        %s294 = scalar_lea.vmem [#allocation2], %s293
        %p295 = pneg %p60
        %p296 = pneg %p57
        %s297 = sand.u32 %s25, 1
        %s298 = scalar_lea.sflag [#allocation6], %s297
        %s299 = sand.u32 %s75, 1
        %s300 = smul.addr %s299, 4
        %s301 = scalar_lea.vmem [#allocation5], %s300
        %p302 = pneg %p88
        %p303 = pneg %p85
        %p304 = pneg %p109
        %p305 = pneg %p106
        %p306 = pneg %p130
        %p307 = pneg %p127
        %p308 = pneg %p151
        %p309 = pneg %p148
        %p310 = pneg %p179
        %p311 = pneg %p176
        %s312 = sand.u32 %s166, 1
        %s313 = scalar_lea.sflag [#allocation4], %s312
        %s314 = sand.u32 %s166, 1
        %s315 = smul.addr %s314, 4
        %s316 = scalar_lea.vmem [#allocation8], %s315
        %v317 = vld [vmem:[%s2] sm:$0xf]
        %v318 = vld [vmem:[%s269] sm:$0xf]
        %v319 = vld [vmem:[#allocation7] sm:$0xf]
        %v320 = vld [vmem:[%s279] sm:$0xf]
        %vm321 = vcmask 31744
        %v323 = vsel %vm321, %v319, 0
        %vm325 = vcmask 1043456
        %v327 = vsel %vm325, %v320, 0
        %329 = vmatpush.msra.mxu0 0.0
        %330 = vmatpush.msra.mxu0 0.0
        %331 = vmatpush.msra.mxu0 0.0
        %332 = vmatpush.msra.mxu0 0.0
        %333 = vmatpush.msra.mxu0 0.0
        %334 = vmatpush.msra.mxu0 0.0
        %335 = vmatpush.msra.mxu0 0.0
        %336 = vmatpush.msra.mxu0 0.0
        %337 = vmatpush.msra.mxu0 0.0
        %338 = vmatpush.msra.mxu0 0.0
        %339 = vmatpush.msra.mxu0 0.0
        %340 = vmatpush.msra.mxu0 0.0
        %341 = vmatpush.msra.mxu0 0.0
        %342 = vmatpush.msra.mxu0 0.0
        %343 = vmatpush.msra.mxu0 0.0
        %344 = vmatpush.msra.mxu0 %v327
        %345 = vmatmul.f32.gmra.mxu0 %v323
        %v346 = vpop.f32.mrf.mxu0
        %v347 = vadd.f32 0.0, %v346
        %348 = vdwg.mxu0
        %v350 = vsel %vm321, %v317, 0
        %v353 = vsel %vm325, %v318, 0
        %355 = vmatpush.msra.mxu0 0.0
        %356 = vmatpush.msra.mxu0 0.0
        %357 = vmatpush.msra.mxu0 0.0
        %358 = vmatpush.msra.mxu0 0.0
        %359 = vmatpush.msra.mxu0 0.0
        %360 = vmatpush.msra.mxu0 0.0
        %361 = vmatpush.msra.mxu0 0.0
        %362 = vmatpush.msra.mxu0 0.0
        %363 = vmatpush.msra.mxu0 0.0
        %364 = vmatpush.msra.mxu0 0.0
        %365 = vmatpush.msra.mxu0 0.0
        %366 = vmatpush.msra.mxu0 0.0
        %367 = vmatpush.msra.mxu0 0.0
        %368 = vmatpush.msra.mxu0 0.0
        %369 = vmatpush.msra.mxu0 0.0
        %370 = vmatpush.msra.mxu0 %v353
        %371 = vmatmul.f32.gmra.mxu0 %v350
        %v372 = vpop.f32.mrf.mxu0
        %v373 = vadd.f32 %v347, %v372
        %374 = vdwg.mxu0
        %v375 = vld [vmem:[%s4] sm:$0xf]
        %377 = vset.pattern.permute.xlu0 0
        %378 = vperm.xlu0 %377, %v375
        %v379 = vpop.permute.xlu0 %378
        %v381 = vadd.f32 %v373, %v379
        %v382 = vadd.f32 %v381, %v318
        %v383 = vmax.f32 %v382, 0.0
        %384 = vst [vmem:[%s316] sm:$0xf] %v383
        %s385 = sand.u32 %s166, 1
        %s386 = scalar_lea.sflag [#allocation4], %s385
        %s387 = sand.u32 %s166, 1
        %s388 = smul.addr %s387, 4
        %s389 = scalar_lea.vmem [#allocation8], %s388
        // Predicated region
        $region53: #{tpu_custom_call.1} parent=39 // pred_check
          %p390 = pneg %p176
        $region54: #{tpu_custom_call.1} parent=39 // pred_check_branch
          %392 = sbr.rel (%p390) target = $region56
        $region55: #{tpu_custom_call.1} parent=39 // pred_region
          %394 = vsyncadd %s386, 0
          %s395 = smul.addr %s29, 2
          %s396 = sadd.s32 %s30, %s395
          %s397 = smul.addr %s396, 4
          %s398 = scalar_lea.hbm %s5, %s397
          %s400 = sshll.u32 %s389, 4
          %s401 = int_to_ptr.vmem [resolvable:$true] %s400
          %s402 = sshll.u32 %s398, 4
          %s403 = int_to_ptr.hbm [resolvable:$true] %s402
          %405 = dma.vmem_to_hbm [thread:$0]  %s401, 64, %s403, %s386
        $region56: #{tpu_custom_call.1} parent=39 // pred_fallthru
          _
      $region40: #{tpu_custom_call.1} parent=5 // pred_fallthru
        _
      %p406 = scmp.le.s32.totalorder 2, %s20
      // Predicated region
      $region57: #{tpu_custom_call.1} parent=5 // pred_check
        %p407 = pneg %p406
      $region58: #{tpu_custom_call.1} parent=5 // pred_check_branch
        %409 = sbr.rel (%p407) target = $region60
      $region59: #{tpu_custom_call.1} parent=5 // pred_region
        %s410 = ssub.s32 %s20, 2
        // Predicated region
        $region61: #{tpu_custom_call.1} parent=59 // pred_check
          %p411 = pneg %p182
        $region62: #{tpu_custom_call.1} parent=59 // pred_check_branch
          %413 = sbr.rel (%p411) target = $region64
        $region63: #{tpu_custom_call.1} parent=59 // pred_region
          %s414 = sand.u32 %s167, 1
          %s415 = scalar_lea.sflag [#allocation4], %s414
          %s416 = sand.u32 %s167, 1
          %s417 = smul.addr %s416, 4
          %s418 = scalar_lea.vmem [#allocation8], %s417
          %420 = dma.done %s415, 64
        $region64: #{tpu_custom_call.1} parent=59 // pred_fallthru
          _
      $region60: #{tpu_custom_call.1} parent=5 // pred_fallthru
        _
    $region6: #{tpu_custom_call.1} parent=1 // loop_footer
      %s24 = sadd.s32 1, %s20
    $region7: #{tpu_custom_call.1} parent=1 // loop_footer_branch
      %19 = sbr.rel target = $region3
    $region8: #{tpu_custom_call.1} parent=1 // loop_exit
      _
    %421 = vsyncpa [#allocation3], 1
    %s422 = scalar_lea.sflag [#allocation3], 1
    %423 = vsyncpa %s422, 1
    %424 = vsyncpa [#allocation6], 1
    %s425 = scalar_lea.sflag [#allocation6], 1
    %426 = vsyncpa %s425, 1
    %427 = vsyncpa [#allocation4], 1
    %s428 = scalar_lea.sflag [#allocation4], 1
    %429 = vsyncpa %s428, 1

</llo_original>
